<compile_context>
chip_gen: v7x
topology: tpu7x:2x2x1
jax: 0.10.0
libtpu: 0.0.40
codegen_flags: <defaults>
</compile_context>

<pallas_src>
import functools

import jax
import jax.numpy as jnp
from jax.experimental import pallas as pl
from jax.experimental.pallas import tpu as pltpu


def _round_up(a, m):
    return ((a + m - 1) // m) * m


def mlp_kernel(x_ref, w1_ref, b1_ref, w2_ref, b2_ref, o_ref):
    # hidden = relu(x @ W1 + b1); MXU matmuls run in the weights' dtype
    # (bf16 by default) with f32 accumulation.
    x = x_ref[...].astype(w1_ref.dtype)
    h = jnp.dot(x, w1_ref[...], preferred_element_type=jnp.float32)
    h = jnp.maximum(h + b1_ref[...], 0.0)          # (TB, 256) + (1, 256)
    # out = hidden @ W2 + b2  -> (TB, 10) block, masked lane stores.
    o = jnp.dot(h.astype(w2_ref.dtype), w2_ref[...],
                preferred_element_type=jnp.float32)
    o_ref[...] = (o + b2_ref[...]).astype(o_ref.dtype)


def mlp_forward(x, w1, b1, w2, b2, *, block_b=2048, mxu_dtype=jnp.bfloat16):
    B, D_in = x.shape
    D_hid = w1.shape[1]
    D_out = w2.shape[1]

    b1 = b1.reshape(1, D_hid)
    b2 = b2.reshape(1, D_out)

    # Cast weights once for MXU throughput (v6e/v7x bf16 MXU); keep biases and
    # accumulation in f32.  mxu_dtype=None keeps exact f32 semantics.
    if mxu_dtype is not None:
        w1 = w1.astype(mxu_dtype)
        w2 = w2.astype(mxu_dtype)

    # Batch tile: multiple of 8 sublanes, capped at block_b, and sized so the
    # grid has >= 2 steps when B allows it (keeps both v7x TensorCores busy).
    TB = min(block_b, max(8, _round_up(pl.cdiv(B, 2), 8)))
    grid = (pl.cdiv(B, TB),)   # ragged last block handled by Pallas masking

    vmem = pltpu.MemorySpace.VMEM

    itemsize = lambda a: a.dtype.itemsize
    cost = pl.CostEstimate(
        flops=2 * B * (D_in * D_hid + D_hid * D_out),
        transcendentals=0,
        bytes_accessed=(B * D_in * itemsize(x)
                        + B * D_out * itemsize(x)
                        + w1.size * itemsize(w1) + w2.size * itemsize(w2)
                        + b1.size * itemsize(b1) + b2.size * itemsize(b2)),
    )

    return pl.pallas_call(
        mlp_kernel,
        out_shape=jax.ShapeDtypeStruct((B, D_out), x.dtype),
        grid_spec=pltpu.PrefetchScalarGridSpec(
            num_scalar_prefetch=0,
            grid=grid,
            in_specs=[
                # x: tiled along batch (double-buffered by the pipeline).
                pl.BlockSpec((TB, D_in), lambda i: (i, 0), memory_space=vmem),
                # Weights / biases: resident in VMEM across all grid steps.
                pl.BlockSpec((D_in, D_hid), lambda i: (0, 0), memory_space=vmem),
                pl.BlockSpec((1, D_hid), lambda i: (0, 0), memory_space=vmem),
                pl.BlockSpec((D_hid, D_out), lambda i: (0, 0), memory_space=vmem),
                pl.BlockSpec((1, D_out), lambda i: (0, 0), memory_space=vmem),
            ],
            out_specs=pl.BlockSpec((TB, D_out), lambda i: (i, 0),
                                   memory_space=vmem),
        ),
        compiler_params=pltpu.CompilerParams(
            # Batch tiles are independent -> shard across TCs on v7x.
            dimension_semantics=("parallel",),
        ),
        cost_estimate=cost,
    )(x, w1, b1, w2, b2)


def mlp_ref(x, w1, b1, w2, b2):
    h = jnp.maximum(x @ w1 + b1, 0.0)
    return h @ w2 + b2


if __name__ == "__main__":
    key = jax.random.PRNGKey(0)
    k_x, k_w1, k_b1, k_w2, k_b2, k_x2 = jax.random.split(key, 6)

    B, D_in, D_hid, D_out = 8, 32, 256, 10

    x = jax.random.normal(k_x, (B, D_in), dtype=jnp.float32)
    # Deterministic init (matches nn.Linear uniform(-1/sqrt(fan_in), 1/sqrt(fan_in)))
    lim1 = 1.0 / jnp.sqrt(jnp.float32(D_in))
    lim2 = 1.0 / jnp.sqrt(jnp.float32(D_hid))
    w1 = jax.random.uniform(k_w1, (D_in, D_hid), jnp.float32, -lim1, lim1)
    b1 = jax.random.uniform(k_b1, (1, D_hid), jnp.float32, -lim1, lim1)
    w2 = jax.random.uniform(k_w2, (D_hid, D_out), jnp.float32, -lim2, lim2)
    b2 = jax.random.uniform(k_b2, (1, D_out), jnp.float32, -lim2, lim2)

    fwd_bf16 = jax.jit(mlp_forward)                                  # default: bf16 MXU operands
    fwd_f32 = jax.jit(functools.partial(mlp_forward, mxu_dtype=None))  # exact f32 path

    # --- small batch (single grid step, ragged block) ------------------------
    ref = mlp_ref(x, w1, b1, w2, b2)

    out_f32 = fwd_f32(x, w1, b1, w2, b2)
    jax.block_until_ready(out_f32)
    assert out_f32.shape == (B, D_out)
    assert jnp.allclose(out_f32, ref, atol=1e-5, rtol=1e-5)

    out_bf16 = fwd_bf16(x, w1, b1, w2, b2)
    jax.block_until_ready(out_bf16)
    assert out_bf16.shape == (B, D_out)
    assert jnp.allclose(out_bf16, ref, atol=2e-2, rtol=2e-2)

    # --- larger, non-multiple batch: 2 grid steps + ragged last block --------
    B2 = 1000
    x2 = jax.random.normal(k_x2, (B2, D_in), dtype=jnp.float32)
    ref2 = mlp_ref(x2, w1, b1, w2, b2)

    out2_f32 = fwd_f32(x2, w1, b1, w2, b2)
    jax.block_until_ready(out2_f32)
    assert out2_f32.shape == (B2, D_out)
    assert jnp.allclose(out2_f32, ref2, atol=1e-5, rtol=1e-5)

    out2_bf16 = fwd_bf16(x2, w1, b1, w2, b2)
    jax.block_until_ready(out2_bf16)
    assert out2_bf16.shape == (B2, D_out)
    assert jnp.allclose(out2_bf16, ref2, atol=2e-2, rtol=2e-2)

    print("KERNEL_OK")
</pallas_src>

<mosaic_0001>
module attributes {stable_mosaic.version = 11 : i64} {
  func.func @mlp_kernel(%arg0: i32, %arg1: memref<8x32xf32, #tpu.memory_space<vmem>>, %arg2: memref<32x256xf32, #tpu.memory_space<vmem>>, %arg3: memref<1x256xf32, #tpu.memory_space<vmem>>, %arg4: memref<256x10xf32, #tpu.memory_space<vmem>>, %arg5: memref<1x10xf32, #tpu.memory_space<vmem>>, %arg6: memref<8x10xf32, #tpu.memory_space<vmem>>) attributes {dimension_semantics = [#tpu.dimension_semantics<parallel>], iteration_bounds = array<i64: 1>, scalar_prefetch = 0 : i64, scratch_operands = 0 : i64, tpu.core_type = #tpu.core_type<tc>, window_params = [{transform_indices = @transform_0, window_bounds = array<i64: 8, 32>}, {pipeline_mode = #tpu.pipeline_mode<synchronous>, transform_indices = @transform_1, window_bounds = array<i64: 32, 256>}, {pipeline_mode = #tpu.pipeline_mode<synchronous>, transform_indices = @transform_2, window_bounds = array<i64: 1, 256>}, {pipeline_mode = #tpu.pipeline_mode<synchronous>, transform_indices = @transform_3, window_bounds = array<i64: 256, 10>}, {pipeline_mode = #tpu.pipeline_mode<synchronous>, transform_indices = @transform_4, window_bounds = array<i64: 1, 10>}, {transform_indices = @transform_5, window_bounds = array<i64: 8, 10>}]} {
    %c0 = arith.constant 0 : index
    %c0_0 = arith.constant 0 : index
    %0 = vector.load %arg1[%c0, %c0_0] : memref<8x32xf32, #tpu.memory_space<vmem>>, vector<8x32xf32>
    %c0_1 = arith.constant 0 : index
    %c0_2 = arith.constant 0 : index
    %1 = vector.load %arg2[%c0_1, %c0_2] : memref<32x256xf32, #tpu.memory_space<vmem>>, vector<32x256xf32>
    %cst = arith.constant dense<0.000000e+00> : vector<8x256xf32>
    %2 = tpu.matmul %0, %1, %cst {dimension_numbers = #tpu.dot_dimension_numbers<[1], [0], [0], [1], [0, 0, 1, 1], [], []>} : vector<8x32xf32>, vector<32x256xf32>, vector<8x256xf32> -> vector<8x256xf32>
    %c0_3 = arith.constant 0 : index
    %c0_4 = arith.constant 0 : index
    %3 = vector.load %arg3[%c0_3, %c0_4] : memref<1x256xf32, #tpu.memory_space<vmem>>, vector<1x256xf32>
    %4 = vector.broadcast %3 : vector<1x256xf32> to vector<8x256xf32>
    %5 = arith.addf %2, %4 : vector<8x256xf32>
    %cst_5 = arith.constant 0.000000e+00 : f32
    %6 = vector.broadcast %cst_5 : f32 to vector<8x256xf32>
    %7 = arith.maximumf %5, %6 : vector<8x256xf32>
    %c0_6 = arith.constant 0 : index
    %c0_7 = arith.constant 0 : index
    %8 = vector.load %arg4[%c0_6, %c0_7] : memref<256x10xf32, #tpu.memory_space<vmem>>, vector<256x10xf32>
    %cst_8 = arith.constant dense<0.000000e+00> : vector<8x10xf32>
    %9 = tpu.matmul %7, %8, %cst_8 {dimension_numbers = #tpu.dot_dimension_numbers<[1], [0], [0], [1], [0, 0, 1, 1], [], []>} : vector<8x256xf32>, vector<256x10xf32>, vector<8x10xf32> -> vector<8x10xf32>
    %c0_9 = arith.constant 0 : index
    %c0_10 = arith.constant 0 : index
    %10 = vector.load %arg5[%c0_9, %c0_10] : memref<1x10xf32, #tpu.memory_space<vmem>>, vector<1x10xf32>
    %11 = vector.broadcast %10 : vector<1x10xf32> to vector<8x10xf32>
    %12 = arith.addf %9, %11 : vector<8x10xf32>
    %c0_11 = arith.constant 0 : index
    %c0_12 = arith.constant 0 : index
    %13 = vector.load %arg6[%c0_11, %c0_12] : memref<8x10xf32, #tpu.memory_space<vmem>>, vector<8x10xf32>
    tpu.vector_store %arg6[%c0_11, %c0_12], %12 {strides = array<i32>} : memref<8x10xf32, #tpu.memory_space<vmem>>, vector<8x10xf32>,
    return
  }
  func.func @transform_0(%arg0: i32) -> (i32, i32) {
    %c0_i32 = arith.constant 0 : i32
    %c0_i32_0 = arith.constant 0 : i32
    return %arg0, %c0_i32 : i32, i32
  }
  func.func @transform_1(%arg0: i32) -> (i32, i32) {
    %c0_i32 = arith.constant 0 : i32
    %c0_i32_0 = arith.constant 0 : i32
    %c0_i32_1 = arith.constant 0 : i32
    return %c0_i32, %c0_i32_0 : i32, i32
  }
  func.func @transform_2(%arg0: i32) -> (i32, i32) {
    %c0_i32 = arith.constant 0 : i32
    %c0_i32_0 = arith.constant 0 : i32
    %c0_i32_1 = arith.constant 0 : i32
    return %c0_i32, %c0_i32_0 : i32, i32
  }
  func.func @transform_3(%arg0: i32) -> (i32, i32) {
    %c0_i32 = arith.constant 0 : i32
    %c0_i32_0 = arith.constant 0 : i32
    %c0_i32_1 = arith.constant 0 : i32
    return %c0_i32, %c0_i32_0 : i32, i32
  }
  func.func @transform_4(%arg0: i32) -> (i32, i32) {
    %c0_i32 = arith.constant 0 : i32
    %c0_i32_0 = arith.constant 0 : i32
    %c0_i32_1 = arith.constant 0 : i32
    return %c0_i32, %c0_i32_0 : i32, i32
  }
  func.func @transform_5(%arg0: i32) -> (i32, i32) {
    %c0_i32 = arith.constant 0 : i32
    %c0_i32_0 = arith.constant 0 : i32
    return %arg0, %c0_i32 : i32, i32
  }
}

</mosaic_0001>

<llo_original>
// kernel: mlp_forward.1
$region0: #{mlp_forward.1}
  #allocation0 [shape = 'u32[]', space=smem, size = 0x4, offset = 0x4, fixed_abs, tag = 'smem constant byte address 0x4 - core index']
  #allocation1 [shape = 'u32[144,128]{1,0:T(1,128)}', space=vmem, size = 0x12000, scoped, tag = 'internal scratch']
  %s0 = inlined_call_operand.vmem [shape: f32[8,32], index: 0, kind: input, shape index: {}]
  %s1 = inlined_call_operand.vmem [shape: f32[32,256], index: 1, kind: input, shape index: {}]
  %s2 = inlined_call_operand.vmem [shape: f32[1,256], index: 2, kind: input, shape index: {}]
  %s3 = inlined_call_operand.vmem [shape: f32[256,10], index: 3, kind: input, shape index: {}]
  %s4 = inlined_call_operand.vmem [shape: f32[1,10], index: 4, kind: input, shape index: {}]
  %s5 = inlined_call_operand.hbm [shape: f32[8,10], index: 5, kind: output, shape index: {}]
  %s6 = sld [smem:[#allocation0]]
  $region30: #{mlp_forward.1} parent=0
    _
  %s8 = ssub.s32 1, %s6
  %s9 = scalar_select 0, %s8, %s6
  $region1: #{mlp_forward.1} parent=0
    #allocation2 [shape = 'u8[4096]{0}', space=vmem, size = 0x1000, scoped, tag = 'output window, operand 0, single buffered']
    #allocation3 [shape = 's32[1]{0}', space=sflag, size = 0x4, scoped, tag = 'scoped memory for mlp_forward.1']
    %10 = vsyncpa [#allocation3], 0
    // Predicated region
    $region2: #{mlp_forward.1} parent=1 // pred_check
      _
    $region3: #{mlp_forward.1} parent=1 // pred_check_branch
      %12 = sbr.rel (0) target = $region5
    $region4: #{mlp_forward.1} parent=1 // pred_region
      _
    $region5: #{mlp_forward.1} parent=1 // pred_fallthru
      _
    // Predicated region
    $region6: #{mlp_forward.1} parent=1 // pred_check
      _
    $region7: #{mlp_forward.1} parent=1 // pred_check_branch
      %14 = sbr.rel (0) target = $region9
    $region8: #{mlp_forward.1} parent=1 // pred_region
      _
    $region9: #{mlp_forward.1} parent=1 // pred_fallthru
      _
    // Predicated region
    $region10: #{mlp_forward.1} parent=1 // pred_check
      _
    $region11: #{mlp_forward.1} parent=1 // pred_check_branch
      %16 = sbr.rel (0) target = $region13
    $region12: #{mlp_forward.1} parent=1 // pred_region
      _
    $region13: #{mlp_forward.1} parent=1 // pred_fallthru
      _
    // Predicated region
    $region14: #{mlp_forward.1} parent=1 // pred_check
      _
    $region15: #{mlp_forward.1} parent=1 // pred_check_branch
      %18 = sbr.rel (0) target = $region17
    $region16: #{mlp_forward.1} parent=1 // pred_region
      _
    $region17: #{mlp_forward.1} parent=1 // pred_fallthru
      _
    // Predicated region
    $region18: #{mlp_forward.1} parent=1 // pred_check
      _
    $region19: #{mlp_forward.1} parent=1 // pred_check_branch
      %20 = sbr.rel (0) target = $region21
    $region20: #{mlp_forward.1} parent=1 // pred_region
      _
    $region21: #{mlp_forward.1} parent=1 // pred_fallthru
      _
    %v21 = vld [vmem:[%s0] sm:$0xff]
    %v22 = vld [vmem:[%s1] sm:$0xff]
    %v23 = vld [vmem:[%s1 + $0x8] sm:$0xff]
    %v24 = vld [vmem:[%s1 + $0x10] sm:$0xff]
    %v25 = vld [vmem:[%s1 + $0x18] sm:$0xff]
    %v26 = vld [vmem:[%s1 + $0x20] sm:$0xff]
    %v27 = vld [vmem:[%s1 + $0x28] sm:$0xff]
    %v28 = vld [vmem:[%s1 + $0x30] sm:$0xff]
    %v29 = vld [vmem:[%s1 + $0x38] sm:$0xff]
    %v30 = vld [vmem:[%s2] sm:$0x3]
    %v32 = vlaneseq
    %v33 = vshrl.u32 %v32, 7
    %v34 = vsub.s32 0, %v33
    %v35 = vrot.slane %v30, %v34
    %v36 = vlaneseq
    %v37 = vshrl.u32 %v36, 7
    %v38 = vsub.s32 1, %v37
    %v39 = vrot.slane %v30, %v38
    %vm42 = vcmask 261120
    %v44 = vsel %vm42, %v21, 0
    %46 = vmatprep.subr.mxu0 %v23
    %47 = vmatpush1.msra.mxu0 %v22
    %48 = vmatprep.subr.mxu0 %v25
    %49 = vmatpush1.msra.mxu0 %v24
    %50 = vmatprep.subr.mxu0 %v27
    %51 = vmatpush1.msra.mxu0 %v26
    %52 = vmatprep.subr.mxu0 %v29
    %53 = vmatpush1.msra.mxu0 %v28
    %54 = vmatprep.subr.mxu0 0.0
    %55 = vmatpush1.msra.mxu0 0.0
    %56 = vmatprep.subr.mxu0 0.0
    %57 = vmatpush1.msra.mxu0 0.0
    %58 = vmatprep.subr.mxu0 0.0
    %59 = vmatpush1.msra.mxu0 0.0
    %60 = vmatprep.subr.mxu0 0.0
    %61 = vmatpush1.msra.mxu0 0.0
    %62 = vmatprep.subr.mxu0 0.0
    %63 = vmatpush1.msra.mxu0 0.0
    %64 = vmatprep.subr.mxu0 0.0
    %65 = vmatpush1.msra.mxu0 0.0
    %66 = vmatprep.subr.mxu0 0.0
    %67 = vmatpush1.msra.mxu0 0.0
    %68 = vmatprep.subr.mxu0 0.0
    %69 = vmatpush1.msra.mxu0 0.0
    %70 = vmatprep.subr.mxu0 0.0
    %71 = vmatpush1.msra.mxu0 0.0
    %72 = vmatprep.subr.mxu0 0.0
    %73 = vmatpush1.msra.mxu0 0.0
    %74 = vmatprep.subr.mxu0 0.0
    %75 = vmatpush1.msra.mxu0 0.0
    %76 = vmatprep.subr.mxu0 0.0
    %77 = vmatpush1.msra.mxu0 0.0
    %78 = vmatprep.subr.mxu0 0.0
    %79 = vmatpush1.msra.mxu0 0.0
    %80 = vmatprep.subr.mxu0 0.0
    %81 = vmatpush1.msra.mxu0 0.0
    %82 = vmatprep.subr.mxu0 0.0
    %83 = vmatpush1.msra.mxu0 0.0
    %84 = vmatprep.subr.mxu0 0.0
    %85 = vmatpush1.msra.mxu0 0.0
    %86 = vmatprep.subr.mxu0 0.0
    %87 = vmatpush1.msra.mxu0 0.0
    %88 = vmatprep.subr.mxu0 0.0
    %89 = vmatpush1.msra.mxu0 0.0
    %90 = vmatprep.subr.mxu0 0.0
    %91 = vmatpush1.msra.mxu0 0.0
    %92 = vmatprep.subr.mxu0 0.0
    %93 = vmatpush1.msra.mxu0 0.0
    %94 = vmatprep.subr.mxu0 0.0
    %95 = vmatpush1.msra.mxu0 0.0
    %96 = vmatprep.subr.mxu0 0.0
    %97 = vmatpush1.msra.mxu0 0.0
    %98 = vmatprep.subr.mxu0 0.0
    %99 = vmatpush1.msra.mxu0 0.0
    %100 = vmatprep.subr.mxu0 0.0
    %101 = vmatpush1.msra.mxu0 0.0
    %102 = vmatprep.subr.mxu0 0.0
    %103 = vmatpush1.msra.mxu0 0.0
    %104 = vmatprep.subr.mxu0 0.0
    %105 = vmatpush1.msra.mxu0 0.0
    %106 = vmatprep.subr.mxu0 0.0
    %107 = vmatpush1.msra.mxu0 0.0
    %108 = vmatprep.subr.mxu0 0.0
    %109 = vmatpush1.msra.mxu0 0.0
    %110 = vmatprep.mubr.f32.mxu0 0.0
    %111 = vmatmul.mubr.f32.gmra.mrb[0].mxu0 %v44
    %v112 = vpop.f32.mrb[0].mxu0
    %v113 = vadd.f32 %v35, %v112
    %v114 = vpop.f32.mrb[0].mxu0
    %v115 = vadd.f32 %v39, %v114
    %116 = vdwg.mxu0
    %v117 = vmax.f32 %v113, 0.0
    %v118 = vmax.f32 %v115, 0.0
    %v119 = vld [vmem:[%s3] sm:$0xff]
    %v120 = vld [vmem:[%s3 + $0x8] sm:$0xff]
    %v121 = vld [vmem:[%s3 + $0x10] sm:$0xff]
    %v122 = vld [vmem:[%s3 + $0x18] sm:$0xff]
    %v123 = vld [vmem:[%s3 + $0x20] sm:$0xff]
    %v124 = vld [vmem:[%s3 + $0x28] sm:$0xff]
    %v125 = vld [vmem:[%s3 + $0x30] sm:$0xff]
    %v126 = vld [vmem:[%s3 + $0x38] sm:$0xff]
    %v127 = vld [vmem:[%s3 + $0x40] sm:$0xff]
    %v128 = vld [vmem:[%s3 + $0x48] sm:$0xff]
    %v129 = vld [vmem:[%s3 + $0x50] sm:$0xff]
    %v130 = vld [vmem:[%s3 + $0x58] sm:$0xff]
    %v131 = vld [vmem:[%s3 + $0x60] sm:$0xff]
    %v132 = vld [vmem:[%s3 + $0x68] sm:$0xff]
    %v133 = vld [vmem:[%s3 + $0x70] sm:$0xff]
    %v134 = vld [vmem:[%s3 + $0x78] sm:$0xff]
    %v135 = vld [vmem:[%s3 + $0x80] sm:$0xff]
    %v136 = vld [vmem:[%s3 + $0x88] sm:$0xff]
    %v137 = vld [vmem:[%s3 + $0x90] sm:$0xff]
    %v138 = vld [vmem:[%s3 + $0x98] sm:$0xff]
    %v139 = vld [vmem:[%s3 + $0xa0] sm:$0xff]
    %v140 = vld [vmem:[%s3 + $0xa8] sm:$0xff]
    %v141 = vld [vmem:[%s3 + $0xb0] sm:$0xff]
    %v142 = vld [vmem:[%s3 + $0xb8] sm:$0xff]
    %v143 = vld [vmem:[%s3 + $0xc0] sm:$0xff]
    %v144 = vld [vmem:[%s3 + $0xc8] sm:$0xff]
    %v145 = vld [vmem:[%s3 + $0xd0] sm:$0xff]
    %v146 = vld [vmem:[%s3 + $0xd8] sm:$0xff]
    %v147 = vld [vmem:[%s3 + $0xe0] sm:$0xff]
    %v148 = vld [vmem:[%s3 + $0xe8] sm:$0xff]
    %v149 = vld [vmem:[%s3 + $0xf0] sm:$0xff]
    %v150 = vld [vmem:[%s3 + $0xf8] sm:$0xff]
    %v151 = vld [vmem:[%s4] sm:$0x1]
    %v153 = vlaneseq
    %v154 = vshrl.u32 %v153, 7
    %v155 = vsub.s32 0, %v154
    %v156 = vrot.slane %v151, %v155
    %158 = vmatprep.subr.mxu0 0.0
    %159 = vmatpush1.msra.mxu0 %v119
    %160 = vmatprep.subr.mxu0 0.0
    %161 = vmatpush1.msra.mxu0 %v120
    %162 = vmatprep.subr.mxu0 0.0
    %163 = vmatpush1.msra.mxu0 %v121
    %164 = vmatprep.subr.mxu0 0.0
    %165 = vmatpush1.msra.mxu0 %v122
    %166 = vmatprep.subr.mxu0 0.0
    %167 = vmatpush1.msra.mxu0 %v123
    %168 = vmatprep.subr.mxu0 0.0
    %169 = vmatpush1.msra.mxu0 %v124
    %170 = vmatprep.subr.mxu0 0.0
    %171 = vmatpush1.msra.mxu0 %v125
    %172 = vmatprep.subr.mxu0 0.0
    %173 = vmatpush1.msra.mxu0 %v126
    %174 = vmatprep.subr.mxu0 0.0
    %175 = vmatpush1.msra.mxu0 %v127
    %176 = vmatprep.subr.mxu0 0.0
    %177 = vmatpush1.msra.mxu0 %v128
    %178 = vmatprep.subr.mxu0 0.0
    %179 = vmatpush1.msra.mxu0 %v129
    %180 = vmatprep.subr.mxu0 0.0
    %181 = vmatpush1.msra.mxu0 %v130
    %182 = vmatprep.subr.mxu0 0.0
    %183 = vmatpush1.msra.mxu0 %v131
    %184 = vmatprep.subr.mxu0 0.0
    %185 = vmatpush1.msra.mxu0 %v132
    %186 = vmatprep.subr.mxu0 0.0
    %187 = vmatpush1.msra.mxu0 %v133
    %188 = vmatprep.subr.mxu0 0.0
    %189 = vmatpush1.msra.mxu0 %v134
    %190 = vmatprep.subr.mxu0 0.0
    %191 = vmatpush1.msra.mxu0 %v135
    %192 = vmatprep.subr.mxu0 0.0
    %193 = vmatpush1.msra.mxu0 %v136
    %194 = vmatprep.subr.mxu0 0.0
    %195 = vmatpush1.msra.mxu0 %v137
    %196 = vmatprep.subr.mxu0 0.0
    %197 = vmatpush1.msra.mxu0 %v138
    %198 = vmatprep.subr.mxu0 0.0
    %199 = vmatpush1.msra.mxu0 %v139
    %200 = vmatprep.subr.mxu0 0.0
    %201 = vmatpush1.msra.mxu0 %v140
    %202 = vmatprep.subr.mxu0 0.0
    %203 = vmatpush1.msra.mxu0 %v141
    %204 = vmatprep.subr.mxu0 0.0
    %205 = vmatpush1.msra.mxu0 %v142
    %206 = vmatprep.subr.mxu0 0.0
    %207 = vmatpush1.msra.mxu0 %v143
    %208 = vmatprep.subr.mxu0 0.0
    %209 = vmatpush1.msra.mxu0 %v144
    %210 = vmatprep.subr.mxu0 0.0
    %211 = vmatpush1.msra.mxu0 %v145
    %212 = vmatprep.subr.mxu0 0.0
    %213 = vmatpush1.msra.mxu0 %v146
    %214 = vmatprep.subr.mxu0 0.0
    %215 = vmatpush1.msra.mxu0 %v147
    %216 = vmatprep.subr.mxu0 0.0
    %217 = vmatpush1.msra.mxu0 %v148
    %218 = vmatprep.subr.mxu0 0.0
    %219 = vmatpush1.msra.mxu0 %v149
    %220 = vmatprep.subr.mxu0 0.0
    %221 = vmatpush1.msra.mxu0 %v150
    %222 = vmatprep.mubr.f32.mxu0 %v118
    %223 = vmatmul.mubr.f32.gmra.mrb[0].mxu0 %v117
    %v224 = vpop.f32.mrb[0].mxu0
    %v225 = vadd.f32 %v156, %v224
    %v226 = vpop.f32.mrb[0].mxu0
    %227 = vdwg.mxu0
    %vm228 = vcmask 80896
    %229 = vst.msk [vmem:[#allocation2] sm:$0xff] %vm228, %v225
    // Predicated region
    $region22: #{mlp_forward.1} parent=1 // pred_check
      _
    $region23: #{mlp_forward.1} parent=1 // pred_check_branch
      %231 = sbr.rel (0) target = $region25
    $region24: #{mlp_forward.1} parent=1 // pred_region
      %s233 = ssub.s32 128, 128
      %234 = vsyncadd [#allocation3], %s233
      %s236 = sshll.u32 [#allocation2], 4
      %s237 = int_to_ptr.vmem [resolvable:$true] %s236
      %239 = dma.vmem_to_hbm [thread:$0]  %s237, 128, %s5, [#allocation3]
    $region25: #{mlp_forward.1} parent=1 // pred_fallthru
      _
    // Predicated region
    $region26: #{mlp_forward.1} parent=1 // pred_check
      _
    $region27: #{mlp_forward.1} parent=1 // pred_check_branch
      %241 = sbr.rel (0) target = $region29
    $region28: #{mlp_forward.1} parent=1 // pred_region
      %242 = dma.done [#allocation3], 128
    $region29: #{mlp_forward.1} parent=1 // pred_fallthru
      _
    %243 = vsyncpa [#allocation3], 1

</llo_original>
